<compile_context>
chip_gen: v7x
topology: tpu7x:2x2x1
jax: 0.10.0
libtpu: 0.0.40
codegen_flags: <defaults>
</compile_context>

<pallas_src>
from typing import NamedTuple

import jax
import jax.numpy as jnp
from jax.experimental import pallas as pl
from jax.experimental.pallas import tpu as pltpu

NEG_SLOPE = 0.01   # torch.nn.LeakyReLU default negative_slope
BN_EPS = 1e-5      # torch.nn.BatchNorm1d default eps


# ----------------------------------------------------------------------------
# Pallas kernel: fc1+bn1+lrelu -> fc2+bn2+lrelu -> fc3 (+bias3+bn3+mean folded)
# ----------------------------------------------------------------------------
def _relation_kernel(x_ref, rc_ref, w1_ref, b1_ref, w2_ref, b2_ref,
                     w3_ref, c3_ref, out_ref):
    # Packed per-row BN constants (period `few`, tiled to tile_m rows):
    #   lane0=s1  lane1=t1  lane2=s2  lane3=t2  lane4=s3/few
    rc = rc_ref[...]                                   # (tile_m, 128) f32
    s1, t1 = rc[:, 0:1], rc[:, 1:2]
    s2, t2 = rc[:, 2:3], rc[:, 3:4]
    r3 = rc[:, 4:5]

    # x streamed as f32; bf16 cast in-kernel (VPU filler hidden under the MXU).
    x = x_ref[...].astype(jnp.bfloat16)                # (tile_m, in_feat)

    # --- rel_fc1: Linear + eval-BN(few) + LeakyReLU (Dropout = identity) ---
    h = jnp.dot(x, w1_ref[...], preferred_element_type=jnp.float32)
    h = (h + b1_ref[...]) * s1 + t1                    # (m + b1)*s[f] + t[f]
    h = jnp.where(h >= 0, h, NEG_SLOPE * h)
    h = h.astype(jnp.bfloat16)

    # --- rel_fc2 ---
    h = jnp.dot(h, w2_ref[...], preferred_element_type=jnp.float32)
    h = (h + b2_ref[...]) * s2 + t2
    h = jnp.where(h >= 0, h, NEG_SLOPE * h)
    h = h.astype(jnp.bfloat16)

    # --- rel_fc3 + bias3 + BN3 + mean(few): per-row weighted sum over `few` ---
    g = jnp.dot(h, w3_ref[...], preferred_element_type=jnp.float32)
    g = g * r3                                         # s3[f] / few, per row
    tile_b = out_ref.shape[0]
    few = g.shape[0] // tile_b
    out_ref[...] = (jnp.sum(g.reshape(tile_b, few, g.shape[1]), axis=1)
                    + c3_ref[...])                     # b3*mean(s3) + mean(t3)


# ----------------------------------------------------------------------------
# One-time parameter prep (hoisted out of the per-call forward path)
# ----------------------------------------------------------------------------
class PreparedRelationParams(NamedTuple):
    w1: jax.Array
    b1: jax.Array
    w2: jax.Array
    b2: jax.Array
    w3: jax.Array
    c3: jax.Array
    rc: jax.Array
    few: int
    in_feat: int
    out_size: int
    out_pad: int
    tile_b: int
    vmem_limit: int


def _round_up(x, m):
    return ((x + m - 1) // m) * m


def _vmem_limit_bytes():
    """Per-generation VMEM limit: 96 MiB on v5e/v6e (128 MiB physical),
    48 MiB otherwise (v7x has 64 MiB per TensorCore)."""
    try:
        kind = jax.devices()[0].device_kind.lower()
    except Exception:
        kind = ""
    if "v5" in kind or "v6" in kind:
        return 96 * 1024 * 1024
    return 48 * 1024 * 1024


def _choose_tile_b(batch_hint, few, in_feat, h1p, h2p, out_pad, budget_bytes):
    """Size the batch tile from a VMEM byte budget (not a fixed row count)."""
    # Approximate VMEM bytes per tile row:
    per_row = (2 * 4 * in_feat                       # x f32, double-buffered
               + 2 * 4 * 128                         # packed per-row constants
               + 4 * (h1p + h2p + out_pad)           # f32 matmul results
               + 2 * (in_feat + h1p + h2p)           # bf16 casts feeding the MXU
               + (2 * 4 * out_pad + few - 1) // few) # output rows (per batch / few)
    weight_bytes = (2 * 2 * (in_feat * h1p + h1p * h2p + h2p * out_pad)
                    + 4 * (h1p + h2p + 2 * out_pad))
    avail = max(budget_bytes - weight_bytes, 1 << 20)
    tile_m = max(16, min(8192, avail // per_row))
    tile_b = max(16, (tile_m // few) // 16 * 16)     # tile_m multiple of 16 (bf16 rows)
    if tile_b >= batch_hint:
        if batch_hint >= 32:
            # keep >= 2 grid steps so both v7x TensorCores get work
            tile_b = _round_up((batch_hint + 1) // 2, 16)
        else:
            tile_b = batch_hint                      # tiny batch: single full block
    return int(tile_b)


def prepare_relation_params(params, few, out_size, *, batch_hint):
    """BN/bias folding, lane-dense zero padding, bf16 weight casts, per-row
    constant packing and tile sizing.  Call once, reuse across forwards."""
    w1, b1 = params["w1"], params["b1"]
    w2, b2 = params["w2"], params["b2"]
    w3, b3 = params["w3"], params["b3"]
    in_feat = int(w1.shape[0])
    h1, h2 = int(w1.shape[1]), int(w2.shape[1])
    h1p, h2p = _round_up(h1, 128), _round_up(h2, 128)
    out_pad = _round_up(out_size, 128)

    vmem_limit = _vmem_limit_bytes()
    tile_b = _choose_tile_b(int(batch_hint), few, in_feat, h1p, h2p, out_pad,
                            vmem_limit // 2)
    tile_m = tile_b * few

    # Eval-mode BatchNorm1d(few) as a per-channel affine.
    def bn_affine(gamma, beta, mean, var):
        s = gamma / jnp.sqrt(var + BN_EPS)
        return s, beta - mean * s

    s1, t1 = bn_affine(*params["bn1"])
    s2, t2 = bn_affine(*params["bn2"])
    s3, t3 = bn_affine(*params["bn3"])

    # Packed per-row constants (period `few`), replicated to tile_m rows.
    rc_small = jnp.zeros((few, 128), jnp.float32)
    rc_small = rc_small.at[:, 0].set(s1).at[:, 1].set(t1)
    rc_small = rc_small.at[:, 2].set(s2).at[:, 3].set(t2)
    rc_small = rc_small.at[:, 4].set(s3 / few)
    rc = jnp.tile(rc_small, (tile_b, 1))             # (tile_m, 128)

    # Lane-dense zero-padded weights (bf16) and biases (f32).
    def pad2(w, rows, cols):
        return jnp.zeros((rows, cols), jnp.float32).at[:w.shape[0], :w.shape[1]].set(w)

    w1p = pad2(w1, in_feat, h1p).astype(jnp.bfloat16)
    w2p = pad2(w2, h1p, h2p).astype(jnp.bfloat16)
    w3p = pad2(w3, h2p, out_pad).astype(jnp.bfloat16)
    b1p = jnp.zeros((1, h1p), jnp.float32).at[0, :h1].set(b1)
    b2p = jnp.zeros((1, h2p), jnp.float32).at[0, :h2].set(b2)

    # Fold bias3 + BN3 shift + mean over `few` into one lane-dense row.
    c3 = jnp.mean(s3) * b3 + jnp.mean(t3)
    c3p = jnp.zeros((1, out_pad), jnp.float32).at[0, :out_size].set(c3)

    return PreparedRelationParams(w1p, b1p, w2p, b2p, w3p, c3p, rc,
                                  int(few), in_feat, int(out_size), out_pad,
                                  tile_b, vmem_limit)


# ----------------------------------------------------------------------------
# Forward wrapper: no host-side cast/pad of x, just the pallas_call
# ----------------------------------------------------------------------------
def relation_meta_learner_forward(inputs, prep):
    B = int(inputs.shape[0])
    few = prep.few
    assert int(inputs.shape[1]) == few
    x2d = inputs.reshape(B * few, -1)                 # metadata-only reshape
    assert int(x2d.shape[1]) == prep.in_feat
    tile_b = prep.tile_b
    tile_m = tile_b * few
    assert tile_b % 8 == 0 or tile_b == B, (
        "prepared tile_b is incompatible with this batch size; re-run "
        "prepare_relation_params with the right batch_hint")
    grid = (pl.cdiv(B, tile_b),)

    out = pl.pallas_call(
        _relation_kernel,
        out_shape=jax.ShapeDtypeStruct((B, prep.out_pad), jnp.float32),
        grid=grid,
        in_specs=[
            pl.BlockSpec((tile_m, prep.in_feat), lambda i: (i, 0)),  # x: streamed rows
            pl.BlockSpec(prep.rc.shape, lambda i: (0, 0)),  # per-row BN consts
            pl.BlockSpec(prep.w1.shape, lambda i: (0, 0)),  # weights / biases:
            pl.BlockSpec(prep.b1.shape, lambda i: (0, 0)),  #   constant index maps
            pl.BlockSpec(prep.w2.shape, lambda i: (0, 0)),  #   -> VMEM-resident,
            pl.BlockSpec(prep.b2.shape, lambda i: (0, 0)),  #   no re-DMA per step
            pl.BlockSpec(prep.w3.shape, lambda i: (0, 0)),
            pl.BlockSpec(prep.c3.shape, lambda i: (0, 0)),
        ],
        out_specs=pl.BlockSpec((tile_b, prep.out_pad), lambda i: (i, 0)),
        compiler_params=pltpu.CompilerParams(
            dimension_semantics=("parallel",),        # 2-TC sharding on v7x
            vmem_limit_bytes=prep.vmem_limit,
        ),
    )(x2d, prep.rc, prep.w1, prep.b1, prep.w2, prep.b2, prep.w3, prep.c3)

    return out[:, :prep.out_size].reshape(B, 1, 1, prep.out_size)


# ----------------------------------------------------------------------------
# Deterministic parameter init (matches module __init__ shapes / init scheme)
# ----------------------------------------------------------------------------
def init_params(key, few, embed_size, num_hidden1, num_hidden2, out_size):
    def xavier_normal(k, fan_in, fan_out):
        std = (2.0 / (fan_in + fan_out)) ** 0.5
        # stored as (in, out) so the kernel does x @ W directly
        return std * jax.random.normal(k, (fan_in, fan_out), jnp.float32)

    def bias_uniform(k, fan_in, fan_out):
        bound = 1.0 / (fan_in ** 0.5)
        return jax.random.uniform(k, (fan_out,), jnp.float32, -bound, bound)

    ks = jax.random.split(key, 6)
    params = {
        "w1": xavier_normal(ks[0], 2 * embed_size, num_hidden1),
        "b1": bias_uniform(ks[1], 2 * embed_size, num_hidden1),
        "w2": xavier_normal(ks[2], num_hidden1, num_hidden2),
        "b2": bias_uniform(ks[3], num_hidden1, num_hidden2),
        "w3": xavier_normal(ks[4], num_hidden2, out_size),
        "b3": bias_uniform(ks[5], num_hidden2, out_size),
    }
    # BatchNorm1d(few): gamma, beta, running_mean, running_var (PyTorch defaults)
    for name in ("bn1", "bn2", "bn3"):
        params[name] = (jnp.ones((few,), jnp.float32),
                        jnp.zeros((few,), jnp.float32),
                        jnp.zeros((few,), jnp.float32),
                        jnp.ones((few,), jnp.float32))
    return params


# ----------------------------------------------------------------------------
# Pure-JAX reference (correctness check only; f32 throughout)
# ----------------------------------------------------------------------------
def _reference(inputs, params, out_size):
    B, few = inputs.shape[0], inputs.shape[1]
    x = inputs.reshape(B, few, -1).astype(jnp.float32)

    def bn(h, gamma, beta, mean, var):
        scale = gamma / jnp.sqrt(var + BN_EPS)
        shift = beta - mean * scale
        return h * scale[None, :, None] + shift[None, :, None]

    h = x @ params["w1"] + params["b1"][None, None, :]
    h = bn(h, *params["bn1"])
    h = jnp.where(h >= 0, h, NEG_SLOPE * h)
    h = h @ params["w2"] + params["b2"][None, None, :]
    h = bn(h, *params["bn2"])
    h = jnp.where(h >= 0, h, NEG_SLOPE * h)
    h = h @ params["w3"] + params["b3"][None, None, :]
    h = bn(h, *params["bn3"])
    return jnp.mean(h, axis=1).reshape(B, 1, 1, out_size)


if __name__ == "__main__":
    # small, forward-consistent shapes
    B, few, embed_size = 2, 8, 32
    num_hidden1, num_hidden2, out_size = 128, 64, 32

    key = jax.random.PRNGKey(0)
    k_in, k_params = jax.random.split(key)

    # inputs: (B, few, 2, embed_size) -> view(B, few, -1) gives 2*embed features
    inputs = jax.random.normal(k_in, (B, few, 2, embed_size), jnp.float32)
    params = init_params(k_params, few, embed_size, num_hidden1, num_hidden2, out_size)

    # one-time prep (BN folding, padding, bf16 casts, tile sizing) -- reused per call
    prep = prepare_relation_params(params, few, out_size, batch_hint=B)

    out = relation_meta_learner_forward(inputs, prep)
    out = jax.block_until_ready(out)

    ref = _reference(inputs, params, out_size)
    assert out.shape == (B, 1, 1, out_size)
    # bf16 MXU operands -> loosened tolerance vs the f32 reference
    max_err = float(jnp.max(jnp.abs(out - ref)))
    assert jnp.allclose(out, ref, atol=5e-2, rtol=5e-2), \
        f"mismatch vs reference (max abs err {max_err})"

    print("KERNEL_OK")
</pallas_src>

<mosaic_0001>
module attributes {stable_mosaic.version = 11 : i64} {
  func.func @_relation_kernel(%arg0: i32, %arg1: memref<16x64xf32, #tpu.memory_space<vmem>>, %arg2: memref<16x128xf32, #tpu.memory_space<vmem>>, %arg3: memref<64x128xbf16, #tpu.memory_space<vmem>>, %arg4: memref<1x128xf32, #tpu.memory_space<vmem>>, %arg5: memref<128x128xbf16, #tpu.memory_space<vmem>>, %arg6: memref<1x128xf32, #tpu.memory_space<vmem>>, %arg7: memref<128x128xbf16, #tpu.memory_space<vmem>>, %arg8: memref<1x128xf32, #tpu.memory_space<vmem>>, %arg9: memref<2x128xf32, #tpu.memory_space<vmem>>) attributes {dimension_semantics = [#tpu.dimension_semantics<parallel>], iteration_bounds = array<i64: 1>, scalar_prefetch = 0 : i64, scratch_operands = 0 : i64, tpu.core_type = #tpu.core_type<tc>, window_params = [{transform_indices = @transform_0, window_bounds = array<i64: 16, 64>}, {pipeline_mode = #tpu.pipeline_mode<synchronous>, transform_indices = @transform_1, window_bounds = array<i64: 16, 128>}, {pipeline_mode = #tpu.pipeline_mode<synchronous>, transform_indices = @transform_2, window_bounds = array<i64: 64, 128>}, {pipeline_mode = #tpu.pipeline_mode<synchronous>, transform_indices = @transform_3, window_bounds = array<i64: 1, 128>}, {pipeline_mode = #tpu.pipeline_mode<synchronous>, transform_indices = @transform_4, window_bounds = array<i64: 128, 128>}, {pipeline_mode = #tpu.pipeline_mode<synchronous>, transform_indices = @transform_5, window_bounds = array<i64: 1, 128>}, {pipeline_mode = #tpu.pipeline_mode<synchronous>, transform_indices = @transform_6, window_bounds = array<i64: 128, 128>}, {pipeline_mode = #tpu.pipeline_mode<synchronous>, transform_indices = @transform_7, window_bounds = array<i64: 1, 128>}, {transform_indices = @transform_8, window_bounds = array<i64: 2, 128>}]} {
    %c0 = arith.constant 0 : index
    %c0_0 = arith.constant 0 : index
    %0 = vector.load %arg2[%c0, %c0_0] : memref<16x128xf32, #tpu.memory_space<vmem>>, vector<16x128xf32>
    %1 = vector.extract_strided_slice %0 {offsets = [0, 0], sizes = [16, 1], strides = [1, 1]} : vector<16x128xf32> to vector<16x1xf32>
    %2 = vector.extract_strided_slice %0 {offsets = [0, 1], sizes = [16, 1], strides = [1, 1]} : vector<16x128xf32> to vector<16x1xf32>
    %3 = vector.extract_strided_slice %0 {offsets = [0, 2], sizes = [16, 1], strides = [1, 1]} : vector<16x128xf32> to vector<16x1xf32>
    %4 = vector.extract_strided_slice %0 {offsets = [0, 3], sizes = [16, 1], strides = [1, 1]} : vector<16x128xf32> to vector<16x1xf32>
    %5 = vector.extract_strided_slice %0 {offsets = [0, 4], sizes = [16, 1], strides = [1, 1]} : vector<16x128xf32> to vector<16x1xf32>
    %c0_1 = arith.constant 0 : index
    %c0_2 = arith.constant 0 : index
    %6 = vector.load %arg1[%c0_1, %c0_2] : memref<16x64xf32, #tpu.memory_space<vmem>>, vector<16x64xf32>
    %7 = arith.truncf %6 : vector<16x64xf32> to vector<16x64xbf16>
    %c0_3 = arith.constant 0 : index
    %c0_4 = arith.constant 0 : index
    %8 = vector.load %arg3[%c0_3, %c0_4] : memref<64x128xbf16, #tpu.memory_space<vmem>>, vector<64x128xbf16>
    %cst = arith.constant dense<0.000000e+00> : vector<16x128xf32>
    %9 = tpu.matmul %7, %8, %cst {dimension_numbers = #tpu.dot_dimension_numbers<[1], [0], [0], [1], [0, 0, 1, 1], [], []>} : vector<16x64xbf16>, vector<64x128xbf16>, vector<16x128xf32> -> vector<16x128xf32>
    %c0_5 = arith.constant 0 : index
    %c0_6 = arith.constant 0 : index
    %10 = vector.load %arg4[%c0_5, %c0_6] : memref<1x128xf32, #tpu.memory_space<vmem>>, vector<1x128xf32>
    %11 = vector.broadcast %10 : vector<1x128xf32> to vector<16x128xf32>
    %12 = arith.addf %9, %11 : vector<16x128xf32>
    %13 = vector.broadcast %1 : vector<16x1xf32> to vector<16x128xf32>
    %14 = arith.mulf %12, %13 : vector<16x128xf32>
    %15 = vector.broadcast %2 : vector<16x1xf32> to vector<16x128xf32>
    %16 = arith.addf %14, %15 : vector<16x128xf32>
    %cst_7 = arith.constant 0.000000e+00 : f32
    %17 = vector.broadcast %cst_7 : f32 to vector<16x128xf32>
    %18 = arith.cmpf oge, %16, %17 : vector<16x128xf32>
    %cst_8 = arith.constant 0.00999999977 : f32
    %19 = vector.broadcast %cst_8 : f32 to vector<16x128xf32>
    %20 = arith.mulf %19, %16 : vector<16x128xf32>
    %21 = arith.select %18, %16, %20 : vector<16x128xi1>, vector<16x128xf32>
    %22 = arith.truncf %21 : vector<16x128xf32> to vector<16x128xbf16>
    %c0_9 = arith.constant 0 : index
    %c0_10 = arith.constant 0 : index
    %23 = vector.load %arg5[%c0_9, %c0_10] : memref<128x128xbf16, #tpu.memory_space<vmem>>, vector<128x128xbf16>
    %cst_11 = arith.constant dense<0.000000e+00> : vector<16x128xf32>
    %24 = tpu.matmul %22, %23, %cst_11 {dimension_numbers = #tpu.dot_dimension_numbers<[1], [0], [0], [1], [0, 0, 1, 1], [], []>} : vector<16x128xbf16>, vector<128x128xbf16>, vector<16x128xf32> -> vector<16x128xf32>
    %c0_12 = arith.constant 0 : index
    %c0_13 = arith.constant 0 : index
    %25 = vector.load %arg6[%c0_12, %c0_13] : memref<1x128xf32, #tpu.memory_space<vmem>>, vector<1x128xf32>
    %26 = vector.broadcast %25 : vector<1x128xf32> to vector<16x128xf32>
    %27 = arith.addf %24, %26 : vector<16x128xf32>
    %28 = vector.broadcast %3 : vector<16x1xf32> to vector<16x128xf32>
    %29 = arith.mulf %27, %28 : vector<16x128xf32>
    %30 = vector.broadcast %4 : vector<16x1xf32> to vector<16x128xf32>
    %31 = arith.addf %29, %30 : vector<16x128xf32>
    %cst_14 = arith.constant 0.000000e+00 : f32
    %32 = vector.broadcast %cst_14 : f32 to vector<16x128xf32>
    %33 = arith.cmpf oge, %31, %32 : vector<16x128xf32>
    %cst_15 = arith.constant 0.00999999977 : f32
    %34 = vector.broadcast %cst_15 : f32 to vector<16x128xf32>
    %35 = arith.mulf %34, %31 : vector<16x128xf32>
    %36 = arith.select %33, %31, %35 : vector<16x128xi1>, vector<16x128xf32>
    %37 = arith.truncf %36 : vector<16x128xf32> to vector<16x128xbf16>
    %c0_16 = arith.constant 0 : index
    %c0_17 = arith.constant 0 : index
    %38 = vector.load %arg7[%c0_16, %c0_17] : memref<128x128xbf16, #tpu.memory_space<vmem>>, vector<128x128xbf16>
    %cst_18 = arith.constant dense<0.000000e+00> : vector<16x128xf32>
    %39 = tpu.matmul %37, %38, %cst_18 {dimension_numbers = #tpu.dot_dimension_numbers<[1], [0], [0], [1], [0, 0, 1, 1], [], []>} : vector<16x128xbf16>, vector<128x128xbf16>, vector<16x128xf32> -> vector<16x128xf32>
    %40 = vector.broadcast %5 : vector<16x1xf32> to vector<16x128xf32>
    %41 = arith.mulf %39, %40 : vector<16x128xf32>
    %42 = vector.shape_cast %41 : vector<16x128xf32> to vector<2x8x128xf32>
    %cst_19 = arith.constant dense<0.000000e+00> : vector<2x128xf32>
    %43 = vector.multi_reduction <add>, %42, %cst_19 [1] : vector<2x8x128xf32> to vector<2x128xf32>
    %c0_20 = arith.constant 0 : index
    %c0_21 = arith.constant 0 : index
    %44 = vector.load %arg8[%c0_20, %c0_21] : memref<1x128xf32, #tpu.memory_space<vmem>>, vector<1x128xf32>
    %45 = vector.broadcast %44 : vector<1x128xf32> to vector<2x128xf32>
    %46 = arith.addf %43, %45 : vector<2x128xf32>
    %c0_22 = arith.constant 0 : index
    %c0_23 = arith.constant 0 : index
    %47 = vector.load %arg9[%c0_22, %c0_23] : memref<2x128xf32, #tpu.memory_space<vmem>>, vector<2x128xf32>
    tpu.vector_store %arg9[%c0_22, %c0_23], %46 {strides = array<i32>} : memref<2x128xf32, #tpu.memory_space<vmem>>, vector<2x128xf32>,
    return
  }
  func.func @transform_0(%arg0: i32) -> (i32, i32) {
    %c0_i32 = arith.constant 0 : i32
    %c0_i32_0 = arith.constant 0 : i32
    return %arg0, %c0_i32 : i32, i32
  }
  func.func @transform_1(%arg0: i32) -> (i32, i32) {
    %c0_i32 = arith.constant 0 : i32
    %c0_i32_0 = arith.constant 0 : i32
    %c0_i32_1 = arith.constant 0 : i32
    return %c0_i32, %c0_i32_0 : i32, i32
  }
  func.func @transform_2(%arg0: i32) -> (i32, i32) {
    %c0_i32 = arith.constant 0 : i32
    %c0_i32_0 = arith.constant 0 : i32
    %c0_i32_1 = arith.constant 0 : i32
    return %c0_i32, %c0_i32_0 : i32, i32
  }
  func.func @transform_3(%arg0: i32) -> (i32, i32) {
    %c0_i32 = arith.constant 0 : i32
    %c0_i32_0 = arith.constant 0 : i32
    %c0_i32_1 = arith.constant 0 : i32
    return %c0_i32, %c0_i32_0 : i32, i32
  }
  func.func @transform_4(%arg0: i32) -> (i32, i32) {
    %c0_i32 = arith.constant 0 : i32
    %c0_i32_0 = arith.constant 0 : i32
    %c0_i32_1 = arith.constant 0 : i32
    return %c0_i32, %c0_i32_0 : i32, i32
  }
  func.func @transform_5(%arg0: i32) -> (i32, i32) {
    %c0_i32 = arith.constant 0 : i32
    %c0_i32_0 = arith.constant 0 : i32
    %c0_i32_1 = arith.constant 0 : i32
    return %c0_i32, %c0_i32_0 : i32, i32
  }
  func.func @transform_6(%arg0: i32) -> (i32, i32) {
    %c0_i32 = arith.constant 0 : i32
    %c0_i32_0 = arith.constant 0 : i32
    %c0_i32_1 = arith.constant 0 : i32
    return %c0_i32, %c0_i32_0 : i32, i32
  }
  func.func @transform_7(%arg0: i32) -> (i32, i32) {
    %c0_i32 = arith.constant 0 : i32
    %c0_i32_0 = arith.constant 0 : i32
    %c0_i32_1 = arith.constant 0 : i32
    return %c0_i32, %c0_i32_0 : i32, i32
  }
  func.func @transform_8(%arg0: i32) -> (i32, i32) {
    %c0_i32 = arith.constant 0 : i32
    %c0_i32_0 = arith.constant 0 : i32
    return %arg0, %c0_i32 : i32, i32
  }
}

</mosaic_0001>

<llo_original>
// kernel: tpu_custom_call.1
$region0: #{tpu_custom_call.1}
  #allocation0 [shape = 'u32[]', space=smem, size = 0x4, offset = 0x4, fixed_abs, tag = 'smem constant byte address 0x4 - core index']
  #allocation1 [shape = 'u32[144,128]{1,0:T(1,128)}', space=vmem, size = 0x12000, scoped, tag = 'internal scratch']
  %s0 = inlined_call_operand.hbm [shape: f32[16,64], index: 0, kind: input, shape index: {}]
  %s1 = inlined_call_operand.hbm [shape: f32[16,128], index: 1, kind: input, shape index: {}]
  %s2 = inlined_call_operand.hbm [shape: bf16[64,128], index: 2, kind: input, shape index: {}]
  %s3 = inlined_call_operand.vmem [shape: f32[1,128], index: 3, kind: input, shape index: {}]
  %s4 = inlined_call_operand.hbm [shape: bf16[128,128], index: 4, kind: input, shape index: {}]
  %s5 = inlined_call_operand.vmem [shape: f32[1,128], index: 5, kind: input, shape index: {}]
  %s6 = inlined_call_operand.hbm [shape: bf16[128,128], index: 6, kind: input, shape index: {}]
  %s7 = inlined_call_operand.vmem [shape: f32[1,128], index: 7, kind: input, shape index: {}]
  %s8 = inlined_call_operand.hbm [shape: f32[2,128], index: 8, kind: output, shape index: {}]
  %s9 = sld [smem:[#allocation0]]
  $region62: #{tpu_custom_call.1} parent=0
    _
  %s11 = ssub.s32 1, %s9
  %s12 = scalar_select 0, %s11, %s9
  $region1: #{tpu_custom_call.1} parent=0
    #allocation2 [shape = 'u8[8192]{0}', space=vmem, size = 0x2000, scoped, tag = 'input window, operand 0, single buffered']
    #allocation3 [shape = 's32[1]{0}', space=sflag, size = 0x4, scoped, tag = 'scoped memory for tpu_custom_call.1']
    #allocation4 [shape = 's32[1]{0}', space=sflag, size = 0x4, scoped, tag = 'scoped memory for tpu_custom_call.1']
    #allocation5 [shape = 'u8[8192]{0}', space=vmem, size = 0x2000, scoped, tag = 'input window, operand 1, single buffered']
    #allocation6 [shape = 's32[1]{0}', space=sflag, size = 0x4, scoped, tag = 'scoped memory for tpu_custom_call.1']
    #allocation7 [shape = 'u8[16384]{0}', space=vmem, size = 0x4000, scoped, tag = 'input window, operand 2, single buffered']
    #allocation8 [shape = 'u8[32768]{0}', space=vmem, size = 0x8000, scoped, tag = 'input window, operand 4, single buffered']
    #allocation9 [shape = 's32[1]{0}', space=sflag, size = 0x4, scoped, tag = 'scoped memory for tpu_custom_call.1']
    #allocation10 [shape = 'u8[32768]{0}', space=vmem, size = 0x8000, scoped, tag = 'input window, operand 6, single buffered']
    #allocation11 [shape = 'u8[1024]{0}', space=vmem, size = 0x400, scoped, tag = 'output window, operand 0, single buffered']
    %13 = vsyncpa [#allocation3], 0
    %14 = vsyncpa [#allocation6], 0
    %15 = vsyncpa [#allocation9], 0
    %16 = vsyncpa [#allocation4], 0
    // Predicated region
    $region2: #{tpu_custom_call.1} parent=1 // pred_check
      _
    $region3: #{tpu_custom_call.1} parent=1 // pred_check_branch
      %18 = sbr.rel (0) target = $region5
    $region4: #{tpu_custom_call.1} parent=1 // pred_region
      %s20 = ssub.s32 256, 256
      %21 = vsyncadd [#allocation3], %s20
      %s22 = sshll.u32 [#allocation2], 4
      %s23 = int_to_ptr.vmem [resolvable:$true] %s22
      %28 = dma.hbm_to_vmem [thread:$0]  %s0, 256, %s23, [#allocation3], 128, 128, 8
    $region5: #{tpu_custom_call.1} parent=1 // pred_fallthru
      _
    // Predicated region
    $region6: #{tpu_custom_call.1} parent=1 // pred_check
      _
    $region7: #{tpu_custom_call.1} parent=1 // pred_check_branch
      %30 = sbr.rel (0) target = $region9
    $region8: #{tpu_custom_call.1} parent=1 // pred_region
      %s32 = ssub.s32 256, 256
      %33 = vsyncadd [#allocation6], %s32
      %s34 = sshll.u32 [#allocation5], 4
      %s35 = int_to_ptr.vmem [resolvable:$true] %s34
      %40 = dma.hbm_to_vmem [thread:$0]  %s1, 256, %s35, [#allocation6], 128, 128, 8
    $region9: #{tpu_custom_call.1} parent=1 // pred_fallthru
      _
    // Predicated region
    $region10: #{tpu_custom_call.1} parent=1 // pred_check
      _
    $region11: #{tpu_custom_call.1} parent=1 // pred_check_branch
      %42 = sbr.rel (0) target = $region13
    $region12: #{tpu_custom_call.1} parent=1 // pred_region
      %s44 = ssub.s32 512, 512
      %45 = vsyncadd [#allocation6], %s44
      %s46 = sshll.u32 [#allocation7], 4
      %s47 = int_to_ptr.vmem [resolvable:$true] %s46
      %52 = dma.hbm_to_vmem [thread:$0]  %s2, 512, %s47, [#allocation6], 64, 64, 4
    $region13: #{tpu_custom_call.1} parent=1 // pred_fallthru
      _
    // Predicated region
    $region14: #{tpu_custom_call.1} parent=1 // pred_check
      _
    $region15: #{tpu_custom_call.1} parent=1 // pred_check_branch
      %54 = sbr.rel (0) target = $region17
    $region16: #{tpu_custom_call.1} parent=1 // pred_region
      _
    $region17: #{tpu_custom_call.1} parent=1 // pred_fallthru
      _
    // Predicated region
    $region18: #{tpu_custom_call.1} parent=1 // pred_check
      _
    $region19: #{tpu_custom_call.1} parent=1 // pred_check_branch
      %56 = sbr.rel (0) target = $region21
    $region20: #{tpu_custom_call.1} parent=1 // pred_region
      %s58 = ssub.s32 1024, 1024
      %59 = vsyncadd [#allocation9], %s58
      %s60 = sshll.u32 [#allocation8], 4
      %s61 = int_to_ptr.vmem [resolvable:$true] %s60
      %66 = dma.hbm_to_vmem [thread:$0]  %s4, 1024, %s61, [#allocation9], 64, 64, 4
    $region21: #{tpu_custom_call.1} parent=1 // pred_fallthru
      _
    // Predicated region
    $region22: #{tpu_custom_call.1} parent=1 // pred_check
      _
    $region23: #{tpu_custom_call.1} parent=1 // pred_check_branch
      %68 = sbr.rel (0) target = $region25
    $region24: #{tpu_custom_call.1} parent=1 // pred_region
      _
    $region25: #{tpu_custom_call.1} parent=1 // pred_fallthru
      _
    // Predicated region
    $region26: #{tpu_custom_call.1} parent=1 // pred_check
      _
    $region27: #{tpu_custom_call.1} parent=1 // pred_check_branch
      %70 = sbr.rel (0) target = $region29
    $region28: #{tpu_custom_call.1} parent=1 // pred_region
      %s72 = ssub.s32 1024, 1024
      %73 = vsyncadd [#allocation9], %s72
      %s74 = sshll.u32 [#allocation10], 4
      %s75 = int_to_ptr.vmem [resolvable:$true] %s74
      %80 = dma.hbm_to_vmem [thread:$0]  %s6, 1024, %s75, [#allocation9], 64, 64, 4
    $region29: #{tpu_custom_call.1} parent=1 // pred_fallthru
      _
    // Predicated region
    $region30: #{tpu_custom_call.1} parent=1 // pred_check
      _
    $region31: #{tpu_custom_call.1} parent=1 // pred_check_branch
      %82 = sbr.rel (0) target = $region33
    $region32: #{tpu_custom_call.1} parent=1 // pred_region
      _
    $region33: #{tpu_custom_call.1} parent=1 // pred_fallthru
      _
    // Predicated region
    $region34: #{tpu_custom_call.1} parent=1 // pred_check
      _
    $region35: #{tpu_custom_call.1} parent=1 // pred_check_branch
      %84 = sbr.rel (0) target = $region37
    $region36: #{tpu_custom_call.1} parent=1 // pred_region
      %85 = dma.done [#allocation3], 256
    $region37: #{tpu_custom_call.1} parent=1 // pred_fallthru
      _
    // Predicated region
    $region38: #{tpu_custom_call.1} parent=1 // pred_check
      _
    $region39: #{tpu_custom_call.1} parent=1 // pred_check_branch
      %87 = sbr.rel (0) target = $region41
    $region40: #{tpu_custom_call.1} parent=1 // pred_region
      %88 = dma.done [#allocation6], 256
    $region41: #{tpu_custom_call.1} parent=1 // pred_fallthru
      _
    // Predicated region
    $region42: #{tpu_custom_call.1} parent=1 // pred_check
      _
    $region43: #{tpu_custom_call.1} parent=1 // pred_check_branch
      %90 = sbr.rel (0) target = $region45
    $region44: #{tpu_custom_call.1} parent=1 // pred_region
      %91 = dma.done [#allocation6], 512
    $region45: #{tpu_custom_call.1} parent=1 // pred_fallthru
      _
    // Predicated region
    $region46: #{tpu_custom_call.1} parent=1 // pred_check
      _
    $region47: #{tpu_custom_call.1} parent=1 // pred_check_branch
      %93 = sbr.rel (0) target = $region49
    $region48: #{tpu_custom_call.1} parent=1 // pred_region
      %94 = dma.done [#allocation9], 1024
    $region49: #{tpu_custom_call.1} parent=1 // pred_fallthru
      _
    // Predicated region
    $region50: #{tpu_custom_call.1} parent=1 // pred_check
      _
    $region51: #{tpu_custom_call.1} parent=1 // pred_check_branch
      %96 = sbr.rel (0) target = $region53
    $region52: #{tpu_custom_call.1} parent=1 // pred_region
      %97 = dma.done [#allocation9], 1024
    $region53: #{tpu_custom_call.1} parent=1 // pred_fallthru
      _
    %v99 = vld [vmem:[#allocation5] sm:$0xff]
    %v100 = vld [vmem:[#allocation5 + $0x8] sm:$0xff]
    %v101 = vld [vmem:[#allocation2] sm:$0xff]
    %v102 = vld [vmem:[#allocation2 + $0x8] sm:$0xff]
    %v103 = vpack.c.bf16 %v102, %v101
    %v104 = vld [vmem:[#allocation7] sm:$0xf]
    %v105 = vld [vmem:[#allocation7 + $0x4] sm:$0xf]
    %v106 = vld [vmem:[#allocation7 + $0x8] sm:$0xf]
    %v107 = vld [vmem:[#allocation7 + $0xc] sm:$0xf]
    %v108 = vld [vmem:[#allocation7 + $0x10] sm:$0xf]
    %v109 = vld [vmem:[#allocation7 + $0x14] sm:$0xf]
    %v110 = vld [vmem:[#allocation7 + $0x18] sm:$0xf]
    %v111 = vld [vmem:[#allocation7 + $0x1c] sm:$0xf]
    %v112 = vld [vmem:[%s3] sm:$0x1]
    %v114 = vlaneseq
    %v115 = vshrl.u32 %v114, 7
    %v116 = vsub.s32 0, %v115
    %v117 = vrot.slane %v112, %v116
    %v127 = vunpack.c.l.b16 %v104
    %v128 = vunpack.c.l.b16 %v105
    %v129 = vunpack.c.l.b16 %v106
    %v130 = vunpack.c.l.b16 %v107
    %v131 = vunpack.c.l.b16 %v108
    %v132 = vunpack.c.l.b16 %v109
    %v133 = vunpack.c.l.b16 %v110
    %v134 = vunpack.c.l.b16 %v111
    %v135 = vpack.c.b16 %v128, %v127
    %v136 = vpack.c.b16 %v130, %v129
    %v137 = vpack.c.b16 %v132, %v131
    %v138 = vpack.c.b16 %v134, %v133
    %vm143 = vcmask 523264
    %v145 = vsel %vm143, %v103, 0
    %147 = vmatprep.subr.bf16.mxu0 0
    %148 = vmatpush1.bf16.msra.mxu0 %v135
    %149 = vmatprep.subr.bf16.mxu0 0
    %150 = vmatpush1.bf16.msra.mxu0 %v136
    %151 = vmatprep.subr.bf16.mxu0 0
    %152 = vmatpush1.bf16.msra.mxu0 %v137
    %153 = vmatprep.subr.bf16.mxu0 0
    %154 = vmatpush1.bf16.msra.mxu0 %v138
    %155 = vmatprep.subr.bf16.mxu0 0
    %156 = vmatpush1.bf16.msra.mxu0 0
    %157 = vmatprep.subr.bf16.mxu0 0
    %158 = vmatpush1.bf16.msra.mxu0 0
    %159 = vmatprep.subr.bf16.mxu0 0
    %160 = vmatpush1.bf16.msra.mxu0 0
    %161 = vmatprep.subr.bf16.mxu0 0
    %162 = vmatpush1.bf16.msra.mxu0 0
    %163 = vmatprep.subr.bf16.mxu0 0
    %164 = vmatpush1.bf16.msra.mxu0 0
    %165 = vmatprep.subr.bf16.mxu0 0
    %166 = vmatpush1.bf16.msra.mxu0 0
    %167 = vmatprep.subr.bf16.mxu0 0
    %168 = vmatpush1.bf16.msra.mxu0 0
    %169 = vmatprep.subr.bf16.mxu0 0
    %170 = vmatpush1.bf16.msra.mxu0 0
    %171 = vmatprep.subr.bf16.mxu0 0
    %172 = vmatpush1.bf16.msra.mxu0 0
    %173 = vmatprep.subr.bf16.mxu0 0
    %174 = vmatpush1.bf16.msra.mxu0 0
    %175 = vmatprep.subr.bf16.mxu0 0
    %176 = vmatpush1.bf16.msra.mxu0 0
    %177 = vmatprep.subr.bf16.mxu0 0
    %178 = vmatpush1.bf16.msra.mxu0 0
    %179 = vmatprep.mubr.bf16.mxu0 0
    %180 = vmatmul.mubr.bf16.gmra.mrb[0].mxu0 %v145
    %v181 = vpop.f32.mrb[0].mxu0
    %v182 = vadd.f32 %v117, %v181
    %v183 = vpop.f32.mrb[0].mxu0
    %v184 = vpop.f32.mrb[0].mxu0
    %v185 = vadd.f32 %v117, %v184
    %v186 = vpop.f32.mrb[0].mxu0
    %187 = vdwg.mxu0
    %189 = vset.pattern.permute.xlu0 0
    %190 = vperm.xlu0 %189, %v99
    %v191 = vpop.permute.xlu0 %190
    %194 = vset.pattern.permute.xlu0 0
    %195 = vperm.xlu0 %194, %v100
    %v196 = vpop.permute.xlu0 %195
    %v198 = vmul.f32 %v182, %v191
    %v199 = vmul.f32 %v185, %v196
    %200 = vset.pattern.permute.xlu0 1
    %201 = vperm.xlu0 %200, %v99
    %v202 = vpop.permute.xlu0 %201
    %204 = vset.pattern.permute.xlu0 1
    %205 = vperm.xlu0 %204, %v100
    %v206 = vpop.permute.xlu0 %205
    %v208 = vadd.f32 %v198, %v202
    %v209 = vadd.f32 %v199, %v206
    %vm210 = vcmp.ge.f32.partialorder %v208, 0.0
    %vm211 = vcmp.ge.f32.partialorder %v209, 0.0
    %v212 = vmul.f32 %v208, 0.01
    %v213 = vmul.f32 %v209, 0.01
    %v214 = vsel %vm210, %v208, %v212
    %v215 = vsel %vm211, %v209, %v213
    %v216 = vpack.c.bf16 %v215, %v214
    %v217 = vld [vmem:[#allocation8] sm:$0xf]
    %v218 = vld [vmem:[#allocation8 + $0x4] sm:$0xf]
    %v219 = vld [vmem:[#allocation8 + $0x8] sm:$0xf]
    %v220 = vld [vmem:[#allocation8 + $0xc] sm:$0xf]
    %v221 = vld [vmem:[#allocation8 + $0x10] sm:$0xf]
    %v222 = vld [vmem:[#allocation8 + $0x14] sm:$0xf]
    %v223 = vld [vmem:[#allocation8 + $0x18] sm:$0xf]
    %v224 = vld [vmem:[#allocation8 + $0x1c] sm:$0xf]
    %v225 = vld [vmem:[#allocation8 + $0x20] sm:$0xf]
    %v226 = vld [vmem:[#allocation8 + $0x24] sm:$0xf]
    %v227 = vld [vmem:[#allocation8 + $0x28] sm:$0xf]
    %v228 = vld [vmem:[#allocation8 + $0x2c] sm:$0xf]
    %v229 = vld [vmem:[#allocation8 + $0x30] sm:$0xf]
    %v230 = vld [vmem:[#allocation8 + $0x34] sm:$0xf]
    %v231 = vld [vmem:[#allocation8 + $0x38] sm:$0xf]
    %v232 = vld [vmem:[#allocation8 + $0x3c] sm:$0xf]
    %v233 = vld [vmem:[%s5] sm:$0x1]
    %v235 = vlaneseq
    %v236 = vshrl.u32 %v235, 7
    %v237 = vsub.s32 0, %v236
    %v238 = vrot.slane %v233, %v237
    %v256 = vunpack.c.l.b16 %v217
    %v257 = vunpack.c.l.b16 %v218
    %v258 = vunpack.c.l.b16 %v219
    %v259 = vunpack.c.l.b16 %v220
    %v260 = vunpack.c.l.b16 %v221
    %v261 = vunpack.c.l.b16 %v222
    %v262 = vunpack.c.l.b16 %v223
    %v263 = vunpack.c.l.b16 %v224
    %v264 = vunpack.c.l.b16 %v225
    %v265 = vunpack.c.l.b16 %v226
    %v266 = vunpack.c.l.b16 %v227
    %v267 = vunpack.c.l.b16 %v228
    %v268 = vunpack.c.l.b16 %v229
    %v269 = vunpack.c.l.b16 %v230
    %v270 = vunpack.c.l.b16 %v231
    %v271 = vunpack.c.l.b16 %v232
    %v272 = vpack.c.b16 %v257, %v256
    %v273 = vpack.c.b16 %v259, %v258
    %v274 = vpack.c.b16 %v261, %v260
    %v275 = vpack.c.b16 %v263, %v262
    %v276 = vpack.c.b16 %v265, %v264
    %v277 = vpack.c.b16 %v267, %v266
    %v278 = vpack.c.b16 %v269, %v268
    %v279 = vpack.c.b16 %v271, %v270
    %288 = vmatprep.subr.bf16.mxu0 0
    %289 = vmatpush1.bf16.msra.mxu0 %v272
    %290 = vmatprep.subr.bf16.mxu0 0
    %291 = vmatpush1.bf16.msra.mxu0 %v273
    %292 = vmatprep.subr.bf16.mxu0 0
    %293 = vmatpush1.bf16.msra.mxu0 %v274
    %294 = vmatprep.subr.bf16.mxu0 0
    %295 = vmatpush1.bf16.msra.mxu0 %v275
    %296 = vmatprep.subr.bf16.mxu0 0
    %297 = vmatpush1.bf16.msra.mxu0 %v276
    %298 = vmatprep.subr.bf16.mxu0 0
    %299 = vmatpush1.bf16.msra.mxu0 %v277
    %300 = vmatprep.subr.bf16.mxu0 0
    %301 = vmatpush1.bf16.msra.mxu0 %v278
    %302 = vmatprep.subr.bf16.mxu0 0
    %303 = vmatpush1.bf16.msra.mxu0 %v279
    %304 = vmatprep.subr.bf16.mxu0 0
    %305 = vmatpush1.bf16.msra.mxu0 0
    %306 = vmatprep.subr.bf16.mxu0 0
    %307 = vmatpush1.bf16.msra.mxu0 0
    %308 = vmatprep.subr.bf16.mxu0 0
    %309 = vmatpush1.bf16.msra.mxu0 0
    %310 = vmatprep.subr.bf16.mxu0 0
    %311 = vmatpush1.bf16.msra.mxu0 0
    %312 = vmatprep.subr.bf16.mxu0 0
    %313 = vmatpush1.bf16.msra.mxu0 0
    %314 = vmatprep.subr.bf16.mxu0 0
    %315 = vmatpush1.bf16.msra.mxu0 0
    %316 = vmatprep.subr.bf16.mxu0 0
    %317 = vmatpush1.bf16.msra.mxu0 0
    %318 = vmatprep.subr.bf16.mxu0 0
    %319 = vmatpush1.bf16.msra.mxu0 0
    %320 = vmatprep.mubr.bf16.mxu0 0
    %321 = vmatmul.mubr.bf16.gmra.mrb[0].mxu0 %v216
    %v322 = vpop.f32.mrb[0].mxu0
    %v323 = vadd.f32 %v238, %v322
    %v324 = vpop.f32.mrb[0].mxu0
    %v325 = vpop.f32.mrb[0].mxu0
    %v326 = vadd.f32 %v238, %v325
    %v327 = vpop.f32.mrb[0].mxu0
    %328 = vdwg.mxu0
    %329 = vset.pattern.permute.xlu0 2
    %330 = vperm.xlu0 %329, %v99
    %v331 = vpop.permute.xlu0 %330
    %333 = vset.pattern.permute.xlu0 2
    %334 = vperm.xlu0 %333, %v100
    %v335 = vpop.permute.xlu0 %334
    %v337 = vmul.f32 %v323, %v331
    %v338 = vmul.f32 %v326, %v335
    %339 = vset.pattern.permute.xlu0 3
    %340 = vperm.xlu0 %339, %v99
    %v341 = vpop.permute.xlu0 %340
    %343 = vset.pattern.permute.xlu0 3
    %344 = vperm.xlu0 %343, %v100
    %v345 = vpop.permute.xlu0 %344
    %v347 = vadd.f32 %v337, %v341
    %v348 = vadd.f32 %v338, %v345
    %vm349 = vcmp.ge.f32.partialorder %v347, 0.0
    %vm350 = vcmp.ge.f32.partialorder %v348, 0.0
    %v351 = vmul.f32 %v347, 0.01
    %v352 = vmul.f32 %v348, 0.01
    %v353 = vsel %vm349, %v347, %v351
    %v354 = vsel %vm350, %v348, %v352
    %v355 = vpack.c.bf16 %v354, %v353
    %v356 = vld [vmem:[#allocation10] sm:$0xf]
    %v357 = vld [vmem:[#allocation10 + $0x4] sm:$0xf]
    %v358 = vld [vmem:[#allocation10 + $0x8] sm:$0xf]
    %v359 = vld [vmem:[#allocation10 + $0xc] sm:$0xf]
    %v360 = vld [vmem:[#allocation10 + $0x10] sm:$0xf]
    %v361 = vld [vmem:[#allocation10 + $0x14] sm:$0xf]
    %v362 = vld [vmem:[#allocation10 + $0x18] sm:$0xf]
    %v363 = vld [vmem:[#allocation10 + $0x1c] sm:$0xf]
    %v364 = vld [vmem:[#allocation10 + $0x20] sm:$0xf]
    %v365 = vld [vmem:[#allocation10 + $0x24] sm:$0xf]
    %v366 = vld [vmem:[#allocation10 + $0x28] sm:$0xf]
    %v367 = vld [vmem:[#allocation10 + $0x2c] sm:$0xf]
    %v368 = vld [vmem:[#allocation10 + $0x30] sm:$0xf]
    %v369 = vld [vmem:[#allocation10 + $0x34] sm:$0xf]
    %v370 = vld [vmem:[#allocation10 + $0x38] sm:$0xf]
    %v371 = vld [vmem:[#allocation10 + $0x3c] sm:$0xf]
    %v388 = vunpack.c.l.b16 %v356
    %v389 = vunpack.c.l.b16 %v357
    %v390 = vunpack.c.l.b16 %v358
    %v391 = vunpack.c.l.b16 %v359
    %v392 = vunpack.c.l.b16 %v360
    %v393 = vunpack.c.l.b16 %v361
    %v394 = vunpack.c.l.b16 %v362
    %v395 = vunpack.c.l.b16 %v363
    %v396 = vunpack.c.l.b16 %v364
    %v397 = vunpack.c.l.b16 %v365
    %v398 = vunpack.c.l.b16 %v366
    %v399 = vunpack.c.l.b16 %v367
    %v400 = vunpack.c.l.b16 %v368
    %v401 = vunpack.c.l.b16 %v369
    %v402 = vunpack.c.l.b16 %v370
    %v403 = vunpack.c.l.b16 %v371
    %v404 = vpack.c.b16 %v389, %v388
    %v405 = vpack.c.b16 %v391, %v390
    %v406 = vpack.c.b16 %v393, %v392
    %v407 = vpack.c.b16 %v395, %v394
    %v408 = vpack.c.b16 %v397, %v396
    %v409 = vpack.c.b16 %v399, %v398
    %v410 = vpack.c.b16 %v401, %v400
    %v411 = vpack.c.b16 %v403, %v402
    %420 = vmatprep.subr.bf16.mxu0 0
    %421 = vmatpush1.bf16.msra.mxu0 %v404
    %422 = vmatprep.subr.bf16.mxu0 0
    %423 = vmatpush1.bf16.msra.mxu0 %v405
    %424 = vmatprep.subr.bf16.mxu0 0
    %425 = vmatpush1.bf16.msra.mxu0 %v406
    %426 = vmatprep.subr.bf16.mxu0 0
    %427 = vmatpush1.bf16.msra.mxu0 %v407
    %428 = vmatprep.subr.bf16.mxu0 0
    %429 = vmatpush1.bf16.msra.mxu0 %v408
    %430 = vmatprep.subr.bf16.mxu0 0
    %431 = vmatpush1.bf16.msra.mxu0 %v409
    %432 = vmatprep.subr.bf16.mxu0 0
    %433 = vmatpush1.bf16.msra.mxu0 %v410
    %434 = vmatprep.subr.bf16.mxu0 0
    %435 = vmatpush1.bf16.msra.mxu0 %v411
    %436 = vmatprep.subr.bf16.mxu0 0
    %437 = vmatpush1.bf16.msra.mxu0 0
    %438 = vmatprep.subr.bf16.mxu0 0
    %439 = vmatpush1.bf16.msra.mxu0 0
    %440 = vmatprep.subr.bf16.mxu0 0
    %441 = vmatpush1.bf16.msra.mxu0 0
    %442 = vmatprep.subr.bf16.mxu0 0
    %443 = vmatpush1.bf16.msra.mxu0 0
    %444 = vmatprep.subr.bf16.mxu0 0
    %445 = vmatpush1.bf16.msra.mxu0 0
    %446 = vmatprep.subr.bf16.mxu0 0
    %447 = vmatpush1.bf16.msra.mxu0 0
    %448 = vmatprep.subr.bf16.mxu0 0
    %449 = vmatpush1.bf16.msra.mxu0 0
    %450 = vmatprep.subr.bf16.mxu0 0
    %451 = vmatpush1.bf16.msra.mxu0 0
    %452 = vmatprep.mubr.bf16.mxu0 0
    %453 = vmatmul.mubr.bf16.gmra.mrb[0].mxu0 %v355
    %v454 = vpop.f32.mrb[0].mxu0
    %v455 = vadd.f32 0.0, %v454
    %v456 = vpop.f32.mrb[0].mxu0
    %v457 = vpop.f32.mrb[0].mxu0
    %v458 = vadd.f32 0.0, %v457
    %v459 = vpop.f32.mrb[0].mxu0
    %460 = vdwg.mxu0
    %461 = vset.pattern.permute.xlu0 4
    %462 = vperm.xlu0 %461, %v99
    %v463 = vpop.permute.xlu0 %462
    %465 = vset.pattern.permute.xlu0 4
    %466 = vperm.xlu0 %465, %v100
    %v467 = vpop.permute.xlu0 %466
    %v469 = vmul.f32 %v455, %v463
    %v470 = vmul.f32 %v458, %v467
    %v471 = vrot.slane %v469, 4
    %v472 = vadd.f32 %v469, %v471
    %v473 = vrot.slane %v472, 2
    %v474 = vadd.f32 %v472, %v473
    %v475 = vrot.slane %v474, 1
    %v476 = vadd.f32 %v474, %v475
    %v477 = vrot.slane %v470, 4
    %v478 = vadd.f32 %v470, %v477
    %v479 = vrot.slane %v478, 2
    %v480 = vadd.f32 %v478, %v479
    %v481 = vrot.slane %v480, 1
    %v482 = vadd.f32 %v480, %v481
    %v483 = vld [vmem:[%s7] sm:$0x1]
    %v485 = vlaneseq
    %v486 = vshrl.u32 %v485, 7
    %v487 = vsub.s32 0, %v486
    %v488 = vrot.slane %v483, %v487
    %v490 = vadd.f32 %v476, %v488
    %v491 = vadd.f32 %v482, %v488
    %v494 = vrot.slane %v491, 7
    %vm495 = vcmask 1041409
    %v496 = vsel %vm495, %v494, %v490
    %498 = vst [vmem:[#allocation11] sm:$0x3] %v496
    // Predicated region
    $region54: #{tpu_custom_call.1} parent=1 // pred_check
      _
    $region55: #{tpu_custom_call.1} parent=1 // pred_check_branch
      %500 = sbr.rel (0) target = $region57
    $region56: #{tpu_custom_call.1} parent=1 // pred_region
      %s502 = ssub.s32 32, 32
      %503 = vsyncadd [#allocation4], %s502
      %s505 = sshll.u32 [#allocation11], 4
      %s506 = int_to_ptr.vmem [resolvable:$true] %s505
      %508 = dma.vmem_to_hbm [thread:$0]  %s506, 32, %s8, [#allocation4]
    $region57: #{tpu_custom_call.1} parent=1 // pred_fallthru
      _
    // Predicated region
    $region58: #{tpu_custom_call.1} parent=1 // pred_check
      _
    $region59: #{tpu_custom_call.1} parent=1 // pred_check_branch
      %510 = sbr.rel (0) target = $region61
    $region60: #{tpu_custom_call.1} parent=1 // pred_region
      %511 = dma.done [#allocation4], 32
    $region61: #{tpu_custom_call.1} parent=1 // pred_fallthru
      _
    %512 = vsyncpa [#allocation3], 1
    %513 = vsyncpa [#allocation6], 1
    %514 = vsyncpa [#allocation9], 1
    %515 = vsyncpa [#allocation4], 1

</llo_original>
